<compile_context>
chip_gen: v7x
topology: tpu7x:2x2x1
jax: 0.10.0
libtpu: 0.0.40
codegen_flags: <defaults>
</compile_context>

<pallas_src>
import functools

import jax
import jax.numpy as jnp
import numpy as np
from jax.experimental import pallas as pl
from jax.experimental.pallas import tpu as pltpu


# ------------------------------- Pallas kernel -------------------------------

def _cbam_kernel(x_ref, cp_ref, g_ref, o_ref, *, C):
    Cp, HW = x_ref.shape
    xv = x_ref[...]                                   # (Cp, HW) channel-padded, spatial flattened
    cp = cp_ref[...]                                  # (Cp, 128) packed channel-attention params
    wfc = cp[:, :Cp]                                  # (Cp, Cp)  1x1-conv weight * 1/(H*W)
    bfc = cp[:, Cp:Cp + 1]                            # (Cp, 1)   1x1-conv bias

    # ---- channel attention: sigmoid(Wfc @ mean_hw(x) + b); FC commuted before the mean pool ----
    z = jnp.dot(wfc, xv, preferred_element_type=jnp.float32)            # (Cp, HW)
    logit_c = jnp.sum(z, axis=1, keepdims=True) + bfc                   # (Cp, 1)
    ca = 1.0 / (1.0 + jnp.exp(-logit_c))                                # (Cp, 1)
    x1 = xv * ca                                                        # (Cp, HW); padded rows stay 0

    # ---- spatial-attention stats over the C real channels ----
    ch = jax.lax.broadcasted_iota(jnp.int32, (Cp, 1), 0)
    mean_row = jnp.sum(x1, axis=0, keepdims=True) * (1.0 / C)           # (1, HW) (padded rows are 0)
    max_row = jnp.max(jnp.where(ch < C, x1, -1e30), axis=0, keepdims=True)  # (1, HW)

    # ---- 7x7 'same' conv as MXU matmuls against precomputed shift matrices ----
    # Pack the two stats rows into an 8-row operand so both matmuls are tile-shaped (8,HW)@(HW,HW).
    row = jax.lax.broadcasted_iota(jnp.int32, (8, HW), 0)
    stats = jnp.where(row == 0, mean_row, jnp.where(row == 1, max_row, 0.0))   # (8, HW)
    t0 = jnp.dot(stats, g_ref[0], preferred_element_type=jnp.float32)          # row 0 = mean @ G0
    t1 = jnp.dot(stats, g_ref[1], preferred_element_type=jnp.float32)          # row 1 = max  @ G1
    s_logit = t0[0:1, :] + t1[1:2, :]                                          # (1, HW)
    sa = 1.0 / (1.0 + jnp.exp(-s_logit))                                       # (1, HW)

    o_ref[...] = (x1 * sa).astype(o_ref.dtype)                                 # dense (Cp, HW) store


# --------------------------------- wrapper -----------------------------------

@jax.jit
def cbam_forward(x, w_fc, b_fc, w_sp):
    N, C, H, W = x.shape
    KS = w_sp.shape[-1]
    pad = KS // 2
    HW = H * W
    Cp = ((C + 7) // 8) * 8
    Pw = ((max(128, Cp + 1) + 127) // 128) * 128

    # x: NCHW -> (N, Cp, H*W), channels zero-padded to a full sublane tile
    xf = x.astype(jnp.float32).reshape(N, C, HW)
    xf = jnp.pad(xf, ((0, 0), (0, Cp - C), (0, 0)))

    # packed channel-attention params: [:, :Cp] = Wfc/(H*W), [:, Cp] = bias
    wfc = (w_fc[:, :, 0, 0] / HW).astype(jnp.float32)                   # (C, C)
    cparams = jnp.zeros((Cp, Pw), jnp.float32)
    cparams = cparams.at[:C, :C].set(wfc)
    cparams = cparams.at[:C, Cp].set(b_fc.astype(jnp.float32))

    # shift matrices: G[ci, q, p] = w_sp[0, ci, kh, kw] if input flat-pos q feeds output flat-pos p
    pos = jnp.arange(HW, dtype=jnp.int32)
    h_out, w_out = pos // W, pos % W
    kh = jnp.arange(KS, dtype=jnp.int32)
    kw = jnp.arange(KS, dtype=jnp.int32)
    h_in = h_out[:, None, None] + kh[None, :, None] - pad               # (HW, KS, KS)
    w_in = w_out[:, None, None] + kw[None, None, :] - pad               # (HW, KS, KS)
    valid = (h_in >= 0) & (h_in < H) & (w_in >= 0) & (w_in < W)
    q = jnp.where(valid, h_in * W + w_in, 0)
    onehot = jax.nn.one_hot(q, HW, dtype=jnp.float32) * valid[..., None]
    G = jnp.einsum('ckl,pklq->cqp', w_sp[0].astype(jnp.float32), onehot)  # (2, HW, HW)

    kernel = functools.partial(_cbam_kernel, C=C)
    out = pl.pallas_call(
        kernel,
        out_shape=jax.ShapeDtypeStruct((N, Cp, HW), jnp.float32),
        grid_spec=pltpu.PrefetchScalarGridSpec(
            num_scalar_prefetch=0,
            grid=(N,),
            in_specs=[
                pl.BlockSpec((None, Cp, HW), lambda n: (n, 0, 0)),   # x, squeezed batch
                pl.BlockSpec((Cp, Pw), lambda n: (0, 0)),            # packed channel params
                pl.BlockSpec((2, HW, HW), lambda n: (0, 0, 0)),      # shift matrices (resident)
            ],
            out_specs=pl.BlockSpec((None, Cp, HW), lambda n: (n, 0, 0)),
        ),
        compiler_params=pltpu.CompilerParams(
            dimension_semantics=("parallel",)),
    )(xf, cparams, G)

    return out[:, :C, :].reshape(N, C, H, W).astype(x.dtype)


# -------------------------------- reference ----------------------------------

def ref_cbam(x, w_fc, b_fc, w_sp):
    x = x.astype(jnp.float32)
    pooled = jnp.mean(x, axis=(2, 3), keepdims=True)                              # (N,C,1,1)
    logit = jnp.einsum('oc,nchw->nohw', w_fc[:, :, 0, 0], pooled) + b_fc[None, :, None, None]
    x1 = x * jax.nn.sigmoid(logit)
    stats = jnp.concatenate([jnp.mean(x1, axis=1, keepdims=True),
                             jnp.max(x1, axis=1, keepdims=True)], axis=1)         # (N,2,H,W)
    p = w_sp.shape[-1] // 2
    s = jax.lax.conv_general_dilated(stats, w_sp, (1, 1), ((p, p), (p, p)),
                                     dimension_numbers=("NCHW", "OIHW", "NCHW"))
    return x1 * jax.nn.sigmoid(s)


# ----------------------------------- main -------------------------------------

if __name__ == "__main__":
    # CBAM(c1=4, kernel_size=7) on x: (2, 4, 16, 16)
    N, C, H, W = 2, 4, 16, 16
    KS = 7

    key = jax.random.PRNGKey(0)
    k1, k2, k3, k4 = jax.random.split(key, 4)
    x = jax.random.normal(k1, (N, C, H, W), dtype=jnp.float32)
    w_fc = 0.3 * jax.random.normal(k2, (C, C, 1, 1), dtype=jnp.float32)   # ChannelAttention.fc
    b_fc = 0.1 * jax.random.normal(k3, (C,), dtype=jnp.float32)
    w_sp = 0.2 * jax.random.normal(k4, (1, 2, KS, KS), dtype=jnp.float32)  # SpatialAttention.cv1

    out = cbam_forward(x, w_fc, b_fc, w_sp)
    out = jax.block_until_ready(out)
    assert out.shape == (N, C, H, W), out.shape

    expected = ref_cbam(x, w_fc, b_fc, w_sp)
    np.testing.assert_allclose(np.asarray(out), np.asarray(expected),
                               rtol=1e-3, atol=1e-3)
    print("KERNEL_OK")
</pallas_src>

<mosaic_0001>
module attributes {stable_mosaic.version = 11 : i64} {
  func.func @_cbam_kernel(%arg0: i32, %arg1: memref<1x8x256xf32, #tpu.memory_space<vmem>>, %arg2: memref<8x128xf32, #tpu.memory_space<vmem>>, %arg3: memref<2x256x256xf32, #tpu.memory_space<vmem>>, %arg4: memref<1x8x256xf32, #tpu.memory_space<vmem>>) attributes {dimension_semantics = [#tpu.dimension_semantics<parallel>], iteration_bounds = array<i64: 2>, scalar_prefetch = 0 : i64, scratch_operands = 0 : i64, tpu.core_type = #tpu.core_type<tc>, window_params = [{transform_indices = @transform_0, window_bounds = array<i64: 1, 8, 256>}, {pipeline_mode = #tpu.pipeline_mode<synchronous>, transform_indices = @transform_1, window_bounds = array<i64: 8, 128>}, {pipeline_mode = #tpu.pipeline_mode<synchronous>, transform_indices = @transform_2, window_bounds = array<i64: 2, 256, 256>}, {transform_indices = @transform_3, window_bounds = array<i64: 1, 8, 256>}]} {
    %c0 = arith.constant 0 : index
    %c0_0 = arith.constant 0 : index
    %c0_1 = arith.constant 0 : index
    %0 = vector.load %arg1[%c0, %c0_0, %c0_1] : memref<1x8x256xf32, #tpu.memory_space<vmem>>, vector<1x8x256xf32>
    %1 = vector.shape_cast %0 : vector<1x8x256xf32> to vector<8x256xf32>
    %c0_2 = arith.constant 0 : index
    %c0_3 = arith.constant 0 : index
    %2 = vector.load %arg2[%c0_2, %c0_3] : memref<8x128xf32, #tpu.memory_space<vmem>>, vector<8x128xf32>
    %3 = vector.extract_strided_slice %2 {offsets = [0, 0], sizes = [8, 8], strides = [1, 1]} : vector<8x128xf32> to vector<8x8xf32>
    %4 = vector.extract_strided_slice %2 {offsets = [0, 8], sizes = [8, 1], strides = [1, 1]} : vector<8x128xf32> to vector<8x1xf32>
    %cst = arith.constant dense<0.000000e+00> : vector<8x256xf32>
    %5 = tpu.matmul %3, %1, %cst {dimension_numbers = #tpu.dot_dimension_numbers<[1], [0], [0], [1], [0, 0, 1, 1], [], []>} : vector<8x8xf32>, vector<8x256xf32>, vector<8x256xf32> -> vector<8x256xf32>
    %cst_4 = arith.constant dense<0.000000e+00> : vector<8xf32>
    %6 = vector.multi_reduction <add>, %5, %cst_4 [1] : vector<8x256xf32> to vector<8xf32>
    %7 = vector.shape_cast %6 : vector<8xf32> to vector<8x1xf32>
    %8 = arith.addf %7, %4 : vector<8x1xf32>
    %cst_5 = arith.constant 0.000000e+00 : f32
    %9 = vector.broadcast %cst_5 : f32 to vector<8x1xf32>
    %10 = arith.subf %9, %8 : vector<8x1xf32>
    %11 = math.exp %10 : vector<8x1xf32>
    %cst_6 = arith.constant 1.000000e+00 : f32
    %12 = vector.broadcast %cst_6 : f32 to vector<8x1xf32>
    %13 = arith.addf %12, %11 : vector<8x1xf32>
    %cst_7 = arith.constant 1.000000e+00 : f32
    %14 = vector.broadcast %cst_7 : f32 to vector<8x1xf32>
    %15 = arith.divf %14, %13 : vector<8x1xf32>
    %16 = vector.broadcast %15 : vector<8x1xf32> to vector<8x256xf32>
    %17 = arith.mulf %1, %16 : vector<8x256xf32>
    %18 = tpu.iota {dimensions = array<i32: 0>} : vector<8x1xi32>
    %cst_8 = arith.constant dense<0.000000e+00> : vector<256xf32>
    %19 = vector.multi_reduction <add>, %17, %cst_8 [0] : vector<8x256xf32> to vector<256xf32>
    %20 = vector.shape_cast %19 : vector<256xf32> to vector<1x256xf32>
    %cst_9 = arith.constant 2.500000e-01 : f32
    %21 = vector.broadcast %cst_9 : f32 to vector<1x256xf32>
    %22 = arith.mulf %20, %21 : vector<1x256xf32>
    %c4_i32 = arith.constant 4 : i32
    %23 = vector.broadcast %c4_i32 : i32 to vector<8x1xi32>
    %24 = arith.cmpi slt, %18, %23 : vector<8x1xi32>
    %cst_10 = arith.constant -1.000000e+30 : f32
    %25 = vector.shape_cast %24 : vector<8x1xi1> to vector<8x1xi1>
    %26 = vector.broadcast %25 : vector<8x1xi1> to vector<8x256xi1>
    %27 = vector.broadcast %cst_10 : f32 to vector<8x256xf32>
    %28 = arith.select %26, %17, %27 : vector<8x256xi1>, vector<8x256xf32>
    %cst_11 = arith.constant dense<0xFF800000> : vector<256xf32>
    %29 = vector.multi_reduction <maximumf>, %28, %cst_11 [0] : vector<8x256xf32> to vector<256xf32>
    %30 = vector.shape_cast %29 : vector<256xf32> to vector<1x256xf32>
    %31 = tpu.iota {dimensions = array<i32: 0>} : vector<8x256xi32>
    %c0_i32 = arith.constant 0 : i32
    %32 = vector.broadcast %c0_i32 : i32 to vector<8x256xi32>
    %33 = arith.cmpi eq, %31, %32 : vector<8x256xi32>
    %c1_i32 = arith.constant 1 : i32
    %34 = vector.broadcast %c1_i32 : i32 to vector<8x256xi32>
    %35 = arith.cmpi eq, %31, %34 : vector<8x256xi32>
    %cst_12 = arith.constant 0.000000e+00 : f32
    %36 = vector.shape_cast %30 : vector<1x256xf32> to vector<1x256xf32>
    %37 = vector.broadcast %36 : vector<1x256xf32> to vector<8x256xf32>
    %38 = vector.broadcast %cst_12 : f32 to vector<8x256xf32>
    %39 = arith.select %35, %37, %38 : vector<8x256xi1>, vector<8x256xf32>
    %40 = vector.shape_cast %22 : vector<1x256xf32> to vector<1x256xf32>
    %41 = vector.broadcast %40 : vector<1x256xf32> to vector<8x256xf32>
    %42 = arith.select %33, %41, %39 : vector<8x256xi1>, vector<8x256xf32>
    %c0_13 = arith.constant 0 : index
    %c0_14 = arith.constant 0 : index
    %c0_15 = arith.constant 0 : index
    %43 = vector.load %arg3[%c0_13, %c0_14, %c0_15] : memref<2x256x256xf32, #tpu.memory_space<vmem>>, vector<1x256x256xf32>
    %44 = vector.shape_cast %43 : vector<1x256x256xf32> to vector<256x256xf32>
    %cst_16 = arith.constant dense<0.000000e+00> : vector<8x256xf32>
    %45 = tpu.matmul %42, %44, %cst_16 {dimension_numbers = #tpu.dot_dimension_numbers<[1], [0], [0], [1], [0, 0, 1, 1], [], []>} : vector<8x256xf32>, vector<256x256xf32>, vector<8x256xf32> -> vector<8x256xf32>
    %c1 = arith.constant 1 : index
    %c0_17 = arith.constant 0 : index
    %c0_18 = arith.constant 0 : index
    %46 = vector.load %arg3[%c1, %c0_17, %c0_18] : memref<2x256x256xf32, #tpu.memory_space<vmem>>, vector<1x256x256xf32>
    %47 = vector.shape_cast %46 : vector<1x256x256xf32> to vector<256x256xf32>
    %cst_19 = arith.constant dense<0.000000e+00> : vector<8x256xf32>
    %48 = tpu.matmul %42, %47, %cst_19 {dimension_numbers = #tpu.dot_dimension_numbers<[1], [0], [0], [1], [0, 0, 1, 1], [], []>} : vector<8x256xf32>, vector<256x256xf32>, vector<8x256xf32> -> vector<8x256xf32>
    %49 = vector.extract_strided_slice %45 {offsets = [0, 0], sizes = [1, 256], strides = [1, 1]} : vector<8x256xf32> to vector<1x256xf32>
    %50 = vector.extract_strided_slice %48 {offsets = [1, 0], sizes = [1, 256], strides = [1, 1]} : vector<8x256xf32> to vector<1x256xf32>
    %51 = arith.addf %49, %50 : vector<1x256xf32>
    %cst_20 = arith.constant 0.000000e+00 : f32
    %52 = vector.broadcast %cst_20 : f32 to vector<1x256xf32>
    %53 = arith.subf %52, %51 : vector<1x256xf32>
    %54 = math.exp %53 : vector<1x256xf32>
    %cst_21 = arith.constant 1.000000e+00 : f32
    %55 = vector.broadcast %cst_21 : f32 to vector<1x256xf32>
    %56 = arith.addf %55, %54 : vector<1x256xf32>
    %cst_22 = arith.constant 1.000000e+00 : f32
    %57 = vector.broadcast %cst_22 : f32 to vector<1x256xf32>
    %58 = arith.divf %57, %56 : vector<1x256xf32>
    %59 = vector.broadcast %58 : vector<1x256xf32> to vector<8x256xf32>
    %60 = arith.mulf %17, %59 : vector<8x256xf32>
    %c0_23 = arith.constant 0 : index
    %c0_24 = arith.constant 0 : index
    %c0_25 = arith.constant 0 : index
    %61 = vector.load %arg4[%c0_23, %c0_24, %c0_25] : memref<1x8x256xf32, #tpu.memory_space<vmem>>, vector<1x8x256xf32>
    %62 = vector.shape_cast %61 : vector<1x8x256xf32> to vector<8x256xf32>
    %63 = vector.shape_cast %60 : vector<8x256xf32> to vector<1x8x256xf32>
    tpu.vector_store %arg4[%c0_23, %c0_24, %c0_25], %63 {strides = array<i32>} : memref<1x8x256xf32, #tpu.memory_space<vmem>>, vector<1x8x256xf32>,
    return
  }
  func.func @transform_0(%arg0: i32) -> (i32, i32, i32) {
    %c0_i32 = arith.constant 0 : i32
    %c0_i32_0 = arith.constant 0 : i32
    %c0_i32_1 = arith.constant 0 : i32
    return %arg0, %c0_i32, %c0_i32_0 : i32, i32, i32
  }
  func.func @transform_1(%arg0: i32) -> (i32, i32) {
    %c0_i32 = arith.constant 0 : i32
    %c0_i32_0 = arith.constant 0 : i32
    %c0_i32_1 = arith.constant 0 : i32
    return %c0_i32, %c0_i32_0 : i32, i32
  }
  func.func @transform_2(%arg0: i32) -> (i32, i32, i32) {
    %c0_i32 = arith.constant 0 : i32
    %c0_i32_0 = arith.constant 0 : i32
    %c0_i32_1 = arith.constant 0 : i32
    %c0_i32_2 = arith.constant 0 : i32
    return %c0_i32, %c0_i32_0, %c0_i32_1 : i32, i32, i32
  }
  func.func @transform_3(%arg0: i32) -> (i32, i32, i32) {
    %c0_i32 = arith.constant 0 : i32
    %c0_i32_0 = arith.constant 0 : i32
    %c0_i32_1 = arith.constant 0 : i32
    return %arg0, %c0_i32, %c0_i32_0 : i32, i32, i32
  }
}

</mosaic_0001>

<llo_original>
// kernel: cbam_forward.1
$region0: #{cbam_forward.1}
  #allocation0 [shape = 'u32[]', space=smem, size = 0x4, offset = 0x4, fixed_abs, tag = 'smem constant byte address 0x4 - core index']
  #allocation1 [shape = 'u32[144,128]{1,0:T(1,128)}', space=vmem, size = 0x12000, scoped, tag = 'internal scratch']
  %s0 = inlined_call_operand.vmem [shape: f32[2,8,256], index: 0, kind: input, shape index: {}]
  %s1 = inlined_call_operand.vmem [shape: f32[8,128], index: 1, kind: input, shape index: {}]
  %s2 = inlined_call_operand.vmem [shape: f32[2,256,256], index: 2, kind: input, shape index: {}]
  %s3 = inlined_call_operand.vmem [shape: f32[2,8,256], index: 3, kind: output, shape index: {}]
  %s4 = sld [smem:[#allocation0]]
  $region45: #{cbam_forward.1} parent=0
    _
  %s6 = ssub.s32 1, %s4
  %s7 = scalar_select 0, %s6, %s4
  loop: start=0, step=1, limit=4
  $region2: #{cbam_forward.1} parent=0 // loop_pre_header
    _
  $region3: #{cbam_forward.1} parent=0 // loop_header
    %s9 = sphi 0, %s13
    %p10 = scmp.ge.s32.totalorder %s9, 4
    %s19 = sphi 0, %s21
    %s22 = sphi 0, %s19
    %s23 = sphi 0, %s22
    %s39 = sphi 0, %s23
    %s43 = sphi 0, %s43
    %s45 = sphi 0, %s43
    %s46 = sphi 0, %s45
    %s60 = sphi 0, %s46
    %s64 = sphi 0, %s64
    %s66 = sphi 0, %s64
    %s67 = sphi 0, %s66
    %s81 = sphi 0, %s67
    %s87 = sphi 0, %s89
    %s90 = sphi 0, %s87
    %s91 = sphi 0, %s90
    %s107 = sphi 0, %s91
  $region4: #{cbam_forward.1} parent=0 // loop_header_branch
    %12 = sbr.rel (%p10) target = $region8
  $region5: #{cbam_forward.1} parent=0 // loop_body
    %s14 = ssub.s32 %s9, 1
    %s15 = ssub.s32 %s9, 2
    %s16 = sadd.s32 %s9, 1
    %s17 = ssub.s32 %s9, %s16
    %p18 = scmp.eq.s32.totalorder %s17, 0
    %s20 = sadd.s32 %s19, 1
    %s21 = scalar_select %p18, %s19, %s20
    %p24 = pneg %p18
    %p25 = scmp.eq.s32.totalorder %s9, 1
    %p26 = por %p24, %p25
    %p27 = scmp.ne.s32.totalorder %s19, %s22
    %p28 = scmp.eq.s32.totalorder %s9, 0
    %p29 = por %p27, %p28
    %p30 = scmp.ne.s32.totalorder %s19, %s22
    %p31 = scmp.eq.s32.totalorder %s14, 1
    %p32 = por %p30, %p31
    %p33 = scmp.ne.s32.totalorder %s22, %s23
    %p34 = scmp.eq.s32.totalorder %s14, 0
    %p35 = por %p33, %p34
    %p36 = scmp.ne.s32.totalorder %s22, %s23
    %p37 = scmp.eq.s32.totalorder %s15, 1
    %p38 = por %p36, %p37
    %p40 = scmp.ne.s32.totalorder %s23, %s39
    %p41 = scmp.eq.s32.totalorder %s15, 0
    %p42 = por %p40, %p41
    %s44 = sadd.s32 %s43, 1
    %p47 = scmp.eq.s32.totalorder %s9, 1
    %p48 = scmp.ne.s32.totalorder %s43, %s45
    %p49 = scmp.eq.s32.totalorder %s9, 0
    %p50 = por %p48, %p49
    %p51 = scmp.ne.s32.totalorder %s43, %s45
    %p52 = scmp.eq.s32.totalorder %s14, 1
    %p53 = por %p51, %p52
    %p54 = scmp.ne.s32.totalorder %s45, %s46
    %p55 = scmp.eq.s32.totalorder %s14, 0
    %p56 = por %p54, %p55
    %p57 = scmp.ne.s32.totalorder %s45, %s46
    %p58 = scmp.eq.s32.totalorder %s15, 1
    %p59 = por %p57, %p58
    %p61 = scmp.ne.s32.totalorder %s46, %s60
    %p62 = scmp.eq.s32.totalorder %s15, 0
    %p63 = por %p61, %p62
    %s65 = sadd.s32 %s64, 1
    %p68 = scmp.eq.s32.totalorder %s9, 1
    %p69 = scmp.ne.s32.totalorder %s64, %s66
    %p70 = scmp.eq.s32.totalorder %s9, 0
    %p71 = por %p69, %p70
    %p72 = scmp.ne.s32.totalorder %s64, %s66
    %p73 = scmp.eq.s32.totalorder %s14, 1
    %p74 = por %p72, %p73
    %p75 = scmp.ne.s32.totalorder %s66, %s67
    %p76 = scmp.eq.s32.totalorder %s14, 0
    %p77 = por %p75, %p76
    %p78 = scmp.ne.s32.totalorder %s66, %s67
    %p79 = scmp.eq.s32.totalorder %s15, 1
    %p80 = por %p78, %p79
    %p82 = scmp.ne.s32.totalorder %s67, %s81
    %p83 = scmp.eq.s32.totalorder %s15, 0
    %p84 = por %p82, %p83
    %s85 = ssub.s32 %s9, %s16
    %p86 = scmp.eq.s32.totalorder %s85, 0
    %s88 = sadd.s32 %s87, 1
    %s89 = scalar_select %p86, %s87, %s88
    %p92 = pneg %p86
    %p93 = scmp.eq.s32.totalorder %s9, 1
    %p94 = por %p92, %p93
    %p95 = scmp.ne.s32.totalorder %s87, %s90
    %p96 = scmp.eq.s32.totalorder %s9, 0
    %p97 = por %p95, %p96
    %p98 = scmp.ne.s32.totalorder %s87, %s90
    %p99 = scmp.eq.s32.totalorder %s14, 1
    %p100 = por %p98, %p99
    %p101 = scmp.ne.s32.totalorder %s90, %s91
    %p102 = scmp.eq.s32.totalorder %s14, 0
    %p103 = por %p101, %p102
    %p104 = scmp.ne.s32.totalorder %s90, %s91
    %p105 = scmp.eq.s32.totalorder %s15, 1
    %p106 = por %p104, %p105
    %p108 = scmp.ne.s32.totalorder %s91, %s107
    %p109 = scmp.eq.s32.totalorder %s15, 0
    %p110 = por %p108, %p109
    %p111 = scmp.le.s32.totalorder 1, %s9
    %p112 = scmp.lt.s32.totalorder %s9, 3
    %p113 = pnand %p111, %p112
    %p114 = pneg %p113
    // Predicated region
    $region9: #{cbam_forward.1} parent=5 // pred_check
      _
    $region10: #{cbam_forward.1} parent=5 // pred_check_branch
      %116 = sbr.rel (%p113) target = $region12
    $region11: #{cbam_forward.1} parent=5 // pred_region
      %s117 = ssub.s32 %s9, 1
      // Predicated region
      $region13: #{cbam_forward.1} parent=11 // pred_check
        %p118 = pneg %p56
      $region14: #{cbam_forward.1} parent=11 // pred_check_branch
        %120 = sbr.rel (%p118) target = $region16
      $region15: #{cbam_forward.1} parent=11 // pred_region
        _
      $region16: #{cbam_forward.1} parent=11 // pred_fallthru
        _
      // Predicated region
      $region17: #{cbam_forward.1} parent=11 // pred_check
        %p121 = pneg %p77
      $region18: #{cbam_forward.1} parent=11 // pred_check_branch
        %123 = sbr.rel (%p121) target = $region20
      $region19: #{cbam_forward.1} parent=11 // pred_region
        _
      $region20: #{cbam_forward.1} parent=11 // pred_fallthru
        _
    $region12: #{cbam_forward.1} parent=5 // pred_fallthru
      _
    %p124 = scmp.lt.s32.totalorder %s9, 2
    // Predicated region
    $region21: #{cbam_forward.1} parent=5 // pred_check
      %p125 = pneg %p124
    $region22: #{cbam_forward.1} parent=5 // pred_check_branch
      %127 = sbr.rel (%p125) target = $region24
    $region23: #{cbam_forward.1} parent=5 // pred_region
      // Predicated region
      $region25: #{cbam_forward.1} parent=23 // pred_check
        %p128 = pneg %p29
      $region26: #{cbam_forward.1} parent=23 // pred_check_branch
        %130 = sbr.rel (%p128) target = $region28
      $region27: #{cbam_forward.1} parent=23 // pred_region
        %p131 = scmp.lt.s32.totalorder %s9, 1
        %s132 = scalar_select %p131, %s9, 1
        %s133 = smul.addr %s132, 2
        %s134 = smul.addr %s133, 8
        %s135 = scalar_lea.vmem %s0, %s134
      $region28: #{cbam_forward.1} parent=23 // pred_fallthru
        _
    $region24: #{cbam_forward.1} parent=5 // pred_fallthru
      _
    %p136 = scmp.le.s32.totalorder 1, %s9
    %p137 = scmp.lt.s32.totalorder %s9, 3
    %p138 = pnand %p136, %p137
    %p139 = pneg %p138
    // Predicated region
    $region29: #{cbam_forward.1} parent=5 // pred_check
      _
    $region30: #{cbam_forward.1} parent=5 // pred_check_branch
      %141 = sbr.rel (%p138) target = $region32
    $region31: #{cbam_forward.1} parent=5 // pred_region
      %s142 = ssub.s32 %s9, 1
      %p143 = scmp.lt.s32.totalorder %s14, 1
      %s144 = scalar_select %p143, %s14, 1
      %s145 = smul.addr %s144, 2
      %s146 = smul.addr %s145, 8
      %s147 = scalar_lea.vmem %s0, %s146
      %p148 = pneg %p35
      %p149 = pneg %p32
      %p150 = pneg %p56
      %p151 = pneg %p53
      %p152 = pneg %p77
      %p153 = pneg %p74
      %p154 = pneg %p103
      %p155 = pneg %p100
      %p156 = scmp.lt.s32.totalorder %s14, 1
      %s157 = scalar_select %p156, %s14, 1
      %s158 = smul.addr %s157, 2
      %s159 = smul.addr %s158, 8
      %s160 = scalar_lea.vmem %s3, %s159
      %p161 = scmp.lt.s32.totalorder %s14, 1
      %s162 = scalar_select %p161, %s14, 1
      %s163 = smul.addr %s162, 2
      %s164 = smul.addr %s163, 8
      %s165 = scalar_lea.vmem %s0, %s164
      %p166 = scmp.lt.s32.totalorder %s14, 1
      %s167 = scalar_select %p166, %s14, 1
      %s168 = smul.addr %s167, 2
      %s169 = smul.addr %s168, 8
      %s170 = scalar_lea.vmem %s3, %s169
      %v171 = vld [vmem:[%s165] sm:$0xff]
      %v172 = vld [vmem:[%s165 + $0x8] sm:$0xff]
      %v173 = vld [vmem:[%s1] sm:$0xff]
      %vm174 = vcmask 64512
      %v176 = vsel %vm174, %v173, 0
      %178 = vmatprep.subr.mxu0 %v172
      %179 = vmatpush1.msra.mxu0 %v171
      %180 = vmatprep.subr.mxu0 0.0
      %181 = vmatpush1.msra.mxu0 0.0
      %182 = vmatprep.subr.mxu0 0.0
      %183 = vmatpush1.msra.mxu0 0.0
      %184 = vmatprep.subr.mxu0 0.0
      %185 = vmatpush1.msra.mxu0 0.0
      %186 = vmatprep.subr.mxu0 0.0
      %187 = vmatpush1.msra.mxu0 0.0
      %188 = vmatprep.subr.mxu0 0.0
      %189 = vmatpush1.msra.mxu0 0.0
      %190 = vmatprep.subr.mxu0 0.0
      %191 = vmatpush1.msra.mxu0 0.0
      %192 = vmatprep.subr.mxu0 0.0
      %193 = vmatpush1.msra.mxu0 0.0
      %194 = vmatprep.subr.mxu0 0.0
      %195 = vmatpush1.msra.mxu0 0.0
      %196 = vmatprep.subr.mxu0 0.0
      %197 = vmatpush1.msra.mxu0 0.0
      %198 = vmatprep.subr.mxu0 0.0
      %199 = vmatpush1.msra.mxu0 0.0
      %200 = vmatprep.subr.mxu0 0.0
      %201 = vmatpush1.msra.mxu0 0.0
      %202 = vmatprep.subr.mxu0 0.0
      %203 = vmatpush1.msra.mxu0 0.0
      %204 = vmatprep.subr.mxu0 0.0
      %205 = vmatpush1.msra.mxu0 0.0
      %206 = vmatprep.subr.mxu0 0.0
      %207 = vmatpush1.msra.mxu0 0.0
      %208 = vmatprep.subr.mxu0 0.0
      %209 = vmatpush1.msra.mxu0 0.0
      %210 = vmatprep.subr.mxu0 0.0
      %211 = vmatpush1.msra.mxu0 0.0
      %212 = vmatprep.subr.mxu0 0.0
      %213 = vmatpush1.msra.mxu0 0.0
      %214 = vmatprep.subr.mxu0 0.0
      %215 = vmatpush1.msra.mxu0 0.0
      %216 = vmatprep.subr.mxu0 0.0
      %217 = vmatpush1.msra.mxu0 0.0
      %218 = vmatprep.subr.mxu0 0.0
      %219 = vmatpush1.msra.mxu0 0.0
      %220 = vmatprep.subr.mxu0 0.0
      %221 = vmatpush1.msra.mxu0 0.0
      %222 = vmatprep.subr.mxu0 0.0
      %223 = vmatpush1.msra.mxu0 0.0
      %224 = vmatprep.subr.mxu0 0.0
      %225 = vmatpush1.msra.mxu0 0.0
      %226 = vmatprep.subr.mxu0 0.0
      %227 = vmatpush1.msra.mxu0 0.0
      %228 = vmatprep.subr.mxu0 0.0
      %229 = vmatpush1.msra.mxu0 0.0
      %230 = vmatprep.subr.mxu0 0.0
      %231 = vmatpush1.msra.mxu0 0.0
      %232 = vmatprep.subr.mxu0 0.0
      %233 = vmatpush1.msra.mxu0 0.0
      %234 = vmatprep.subr.mxu0 0.0
      %235 = vmatpush1.msra.mxu0 0.0
      %236 = vmatprep.subr.mxu0 0.0
      %237 = vmatpush1.msra.mxu0 0.0
      %238 = vmatprep.subr.mxu0 0.0
      %239 = vmatpush1.msra.mxu0 0.0
      %240 = vmatprep.subr.mxu0 0.0
      %241 = vmatpush1.msra.mxu0 0.0
      %242 = vmatprep.mubr.f32.mxu0 0.0
      %243 = vmatmul.mubr.f32.gmra.mrb[0].mxu0 %v176
      %v244 = vpop.f32.mrb[0].mxu0
      %v245 = vadd.f32 0.0, %v244
      %v246 = vpop.f32.mrb[0].mxu0
      %v247 = vadd.f32 0.0, %v246
      %248 = vdwg.mxu0
      %v249 = vadd.f32 %v245, %v247
      %250 = vadd.xlane.f32.xlu0 %v249
      %v251 = vpop.xlane.xlu0 %250
      %v252 = vadd.f32 %v251, %v173
      %v253 = vsub.f32 0.0, %v252
      %v254 = vmul.f32 %v253, 1.442695
      %v255 = vpow.pop %v254
      %v256 = vadd.f32 %v255, 1.0
      %v257 = vrcp.pop %v256
      %v258 = vmul.f32 1.0, %v257
      %260 = vset.pattern.permute.xlu0 8
      %261 = vperm.xlu0 %260, %v258
      %v262 = vpop.permute.xlu0 %261
      %v264 = vmul.f32 %v171, %v262
      %v265 = vmul.f32 %v172, %v262
      %v266 = vlaneseq
      %v267 = vshrl.u32 %v266, 7
      %v268 = vrot.slane %v264, 4
      %v269 = vadd.f32 %v264, %v268
      %v270 = vrot.slane %v269, 2
      %v271 = vadd.f32 %v269, %v270
      %v272 = vrot.slane %v271, 1
      %v273 = vadd.f32 %v271, %v272
      %v274 = vrot.slane %v265, 4
      %v275 = vadd.f32 %v265, %v274
      %v276 = vrot.slane %v275, 2
      %v277 = vadd.f32 %v275, %v276
      %v278 = vrot.slane %v277, 1
      %v279 = vadd.f32 %v277, %v278
      %v280 = vmul.f32 %v273, 0.25
      %v281 = vmul.f32 %v279, 0.25
      %vm282 = vcmp.lt.s32.totalorder %v267, 4
      %v283 = vsel %vm282, 1, 0
      %vm284 = vcmp.eq.s32.totalorder %v283, 1
      %v285 = vsel %vm284, %v264, -1e+30
      %v286 = vsel %vm284, %v265, -1e+30
      %v287 = vrot.slane %v285, 4
      %v288 = vmax.f32 %v285, %v287
      %v289 = vrot.slane %v288, 2
      %v290 = vmax.f32 %v288, %v289
      %v291 = vrot.slane %v290, 1
      %v292 = vmax.f32 %v290, %v291
      %v293 = vrot.slane %v286, 4
      %v294 = vmax.f32 %v286, %v293
      %v295 = vrot.slane %v294, 2
      %v296 = vmax.f32 %v294, %v295
      %v297 = vrot.slane %v296, 1
      %v298 = vmax.f32 %v296, %v297
      %vm299 = vcmp.eq.s32.totalorder %v267, 0
      %vm300 = vcmp.eq.s32.totalorder %v267, 1
      %v301 = vsel %vm300, %v292, 0.0
      %v302 = vsel %vm300, %v298, 0.0
      %v303 = vsel %vm299, %v280, %v301
      %v304 = vsel %vm299, %v281, %v302
      %v305 = vld [vmem:[%s2] sm:$0xff]
      %v306 = vld [vmem:[%s2 + $0x8] sm:$0xff]
      %v307 = vld [vmem:[%s2 + $0x10] sm:$0xff]
      %v308 = vld [vmem:[%s2 + $0x18] sm:$0xff]
      %v309 = vld [vmem:[%s2 + $0x20] sm:$0xff]
      %v310 = vld [vmem:[%s2 + $0x28] sm:$0xff]
      %v311 = vld [vmem:[%s2 + $0x30] sm:$0xff]
      %v312 = vld [vmem:[%s2 + $0x38] sm:$0xff]
      %v313 = vld [vmem:[%s2 + $0x40] sm:$0xff]
      %v314 = vld [vmem:[%s2 + $0x48] sm:$0xff]
      %v315 = vld [vmem:[%s2 + $0x50] sm:$0xff]
      %v316 = vld [vmem:[%s2 + $0x58] sm:$0xff]
      %v317 = vld [vmem:[%s2 + $0x60] sm:$0xff]
      %v318 = vld [vmem:[%s2 + $0x68] sm:$0xff]
      %v319 = vld [vmem:[%s2 + $0x70] sm:$0xff]
      %v320 = vld [vmem:[%s2 + $0x78] sm:$0xff]
      %v321 = vld [vmem:[%s2 + $0x80] sm:$0xff]
      %v322 = vld [vmem:[%s2 + $0x88] sm:$0xff]
      %v323 = vld [vmem:[%s2 + $0x90] sm:$0xff]
      %v324 = vld [vmem:[%s2 + $0x98] sm:$0xff]
      %v325 = vld [vmem:[%s2 + $0xa0] sm:$0xff]
      %v326 = vld [vmem:[%s2 + $0xa8] sm:$0xff]
      %v327 = vld [vmem:[%s2 + $0xb0] sm:$0xff]
      %v328 = vld [vmem:[%s2 + $0xb8] sm:$0xff]
      %v329 = vld [vmem:[%s2 + $0xc0] sm:$0xff]
      %v330 = vld [vmem:[%s2 + $0xc8] sm:$0xff]
      %v331 = vld [vmem:[%s2 + $0xd0] sm:$0xff]
      %v332 = vld [vmem:[%s2 + $0xd8] sm:$0xff]
      %v333 = vld [vmem:[%s2 + $0xe0] sm:$0xff]
      %v334 = vld [vmem:[%s2 + $0xe8] sm:$0xff]
      %v335 = vld [vmem:[%s2 + $0xf0] sm:$0xff]
      %v336 = vld [vmem:[%s2 + $0xf8] sm:$0xff]
      %v337 = vld [vmem:[%s2 + $0x100] sm:$0xff]
      %v338 = vld [vmem:[%s2 + $0x108] sm:$0xff]
      %v339 = vld [vmem:[%s2 + $0x110] sm:$0xff]
      %v340 = vld [vmem:[%s2 + $0x118] sm:$0xff]
      %v341 = vld [vmem:[%s2 + $0x120] sm:$0xff]
      %v342 = vld [vmem:[%s2 + $0x128] sm:$0xff]
      %v343 = vld [vmem:[%s2 + $0x130] sm:$0xff]
      %v344 = vld [vmem:[%s2 + $0x138] sm:$0xff]
      %v345 = vld [vmem:[%s2 + $0x140] sm:$0xff]
      %v346 = vld [vmem:[%s2 + $0x148] sm:$0xff]
      %v347 = vld [vmem:[%s2 + $0x150] sm:$0xff]
      %v348 = vld [vmem:[%s2 + $0x158] sm:$0xff]
      %v349 = vld [vmem:[%s2 + $0x160] sm:$0xff]
      %v350 = vld [vmem:[%s2 + $0x168] sm:$0xff]
      %v351 = vld [vmem:[%s2 + $0x170] sm:$0xff]
      %v352 = vld [vmem:[%s2 + $0x178] sm:$0xff]
      %v353 = vld [vmem:[%s2 + $0x180] sm:$0xff]
      %v354 = vld [vmem:[%s2 + $0x188] sm:$0xff]
      %v355 = vld [vmem:[%s2 + $0x190] sm:$0xff]
      %v356 = vld [vmem:[%s2 + $0x198] sm:$0xff]
      %v357 = vld [vmem:[%s2 + $0x1a0] sm:$0xff]
      %v358 = vld [vmem:[%s2 + $0x1a8] sm:$0xff]
      %v359 = vld [vmem:[%s2 + $0x1b0] sm:$0xff]
      %v360 = vld [vmem:[%s2 + $0x1b8] sm:$0xff]
      %v361 = vld [vmem:[%s2 + $0x1c0] sm:$0xff]
      %v362 = vld [vmem:[%s2 + $0x1c8] sm:$0xff]
      %v363 = vld [vmem:[%s2 + $0x1d0] sm:$0xff]
      %v364 = vld [vmem:[%s2 + $0x1d8] sm:$0xff]
      %v365 = vld [vmem:[%s2 + $0x1e0] sm:$0xff]
      %v366 = vld [vmem:[%s2 + $0x1e8] sm:$0xff]
      %v367 = vld [vmem:[%s2 + $0x1f0] sm:$0xff]
      %v368 = vld [vmem:[%s2 + $0x1f8] sm:$0xff]
      %369 = vmatprep.subr.mxu0 %v306
      %370 = vmatpush1.msra.mxu0 %v305
      %371 = vmatprep.subr.mxu0 %v308
      %372 = vmatpush1.msra.mxu0 %v307
      %373 = vmatprep.subr.mxu0 %v310
      %374 = vmatpush1.msra.mxu0 %v309
      %375 = vmatprep.subr.mxu0 %v312
      %376 = vmatpush1.msra.mxu0 %v311
      %377 = vmatprep.subr.mxu0 %v314
      %378 = vmatpush1.msra.mxu0 %v313
      %379 = vmatprep.subr.mxu0 %v316
      %380 = vmatpush1.msra.mxu0 %v315
      %381 = vmatprep.subr.mxu0 %v318
      %382 = vmatpush1.msra.mxu0 %v317
      %383 = vmatprep.subr.mxu0 %v320
      %384 = vmatpush1.msra.mxu0 %v319
      %385 = vmatprep.subr.mxu0 %v322
      %386 = vmatpush1.msra.mxu0 %v321
      %387 = vmatprep.subr.mxu0 %v324
      %388 = vmatpush1.msra.mxu0 %v323
      %389 = vmatprep.subr.mxu0 %v326
      %390 = vmatpush1.msra.mxu0 %v325
      %391 = vmatprep.subr.mxu0 %v328
      %392 = vmatpush1.msra.mxu0 %v327
      %393 = vmatprep.subr.mxu0 %v330
      %394 = vmatpush1.msra.mxu0 %v329
      %395 = vmatprep.subr.mxu0 %v332
      %396 = vmatpush1.msra.mxu0 %v331
      %397 = vmatprep.subr.mxu0 %v334
      %398 = vmatpush1.msra.mxu0 %v333
      %399 = vmatprep.subr.mxu0 %v336
      %400 = vmatpush1.msra.mxu0 %v335
      %401 = vmatprep.subr.mxu0 %v338
      %402 = vmatpush1.msra.mxu0 %v337
      %403 = vmatprep.subr.mxu0 %v340
      %404 = vmatpush1.msra.mxu0 %v339
      %405 = vmatprep.subr.mxu0 %v342
      %406 = vmatpush1.msra.mxu0 %v341
      %407 = vmatprep.subr.mxu0 %v344
      %408 = vmatpush1.msra.mxu0 %v343
      %409 = vmatprep.subr.mxu0 %v346
      %410 = vmatpush1.msra.mxu0 %v345
      %411 = vmatprep.subr.mxu0 %v348
      %412 = vmatpush1.msra.mxu0 %v347
      %413 = vmatprep.subr.mxu0 %v350
      %414 = vmatpush1.msra.mxu0 %v349
      %415 = vmatprep.subr.mxu0 %v352
      %416 = vmatpush1.msra.mxu0 %v351
      %417 = vmatprep.subr.mxu0 %v354
      %418 = vmatpush1.msra.mxu0 %v353
      %419 = vmatprep.subr.mxu0 %v356
      %420 = vmatpush1.msra.mxu0 %v355
      %421 = vmatprep.subr.mxu0 %v358
      %422 = vmatpush1.msra.mxu0 %v357
      %423 = vmatprep.subr.mxu0 %v360
      %424 = vmatpush1.msra.mxu0 %v359
      %425 = vmatprep.subr.mxu0 %v362
      %426 = vmatpush1.msra.mxu0 %v361
      %427 = vmatprep.subr.mxu0 %v364
      %428 = vmatpush1.msra.mxu0 %v363
      %429 = vmatprep.subr.mxu0 %v366
      %430 = vmatpush1.msra.mxu0 %v365
      %431 = vmatprep.subr.mxu0 %v368
      %432 = vmatpush1.msra.mxu0 %v367
      %433 = vmatprep.mubr.f32.mxu0 %v304
      %434 = vmatmul.mubr.f32.gmra.mrb[0].mxu0 %v303
      %v435 = vpop.f32.mrb[0].mxu0
      %v436 = vadd.f32 0.0, %v435
      %v437 = vpop.f32.mrb[0].mxu0
      %v438 = vadd.f32 0.0, %v437
      %439 = vdwg.mxu0
      %s440 = scalar_lea.vmem %s2, 512
      %v441 = vld [vmem:[%s440] sm:$0xff]
      %v442 = vld [vmem:[%s440 + $0x8] sm:$0xff]
      %v443 = vld [vmem:[%s440 + $0x10] sm:$0xff]
      %v444 = vld [vmem:[%s440 + $0x18] sm:$0xff]
      %v445 = vld [vmem:[%s440 + $0x20] sm:$0xff]
      %v446 = vld [vmem:[%s440 + $0x28] sm:$0xff]
      %v447 = vld [vmem:[%s440 + $0x30] sm:$0xff]
      %v448 = vld [vmem:[%s440 + $0x38] sm:$0xff]
      %v449 = vld [vmem:[%s440 + $0x40] sm:$0xff]
      %v450 = vld [vmem:[%s440 + $0x48] sm:$0xff]
      %v451 = vld [vmem:[%s440 + $0x50] sm:$0xff]
      %v452 = vld [vmem:[%s440 + $0x58] sm:$0xff]
      %v453 = vld [vmem:[%s440 + $0x60] sm:$0xff]
      %v454 = vld [vmem:[%s440 + $0x68] sm:$0xff]
      %v455 = vld [vmem:[%s440 + $0x70] sm:$0xff]
      %v456 = vld [vmem:[%s440 + $0x78] sm:$0xff]
      %v457 = vld [vmem:[%s440 + $0x80] sm:$0xff]
      %v458 = vld [vmem:[%s440 + $0x88] sm:$0xff]
      %v459 = vld [vmem:[%s440 + $0x90] sm:$0xff]
      %v460 = vld [vmem:[%s440 + $0x98] sm:$0xff]
      %v461 = vld [vmem:[%s440 + $0xa0] sm:$0xff]
      %v462 = vld [vmem:[%s440 + $0xa8] sm:$0xff]
      %v463 = vld [vmem:[%s440 + $0xb0] sm:$0xff]
      %v464 = vld [vmem:[%s440 + $0xb8] sm:$0xff]
      %v465 = vld [vmem:[%s440 + $0xc0] sm:$0xff]
      %v466 = vld [vmem:[%s440 + $0xc8] sm:$0xff]
      %v467 = vld [vmem:[%s440 + $0xd0] sm:$0xff]
      %v468 = vld [vmem:[%s440 + $0xd8] sm:$0xff]
      %v469 = vld [vmem:[%s440 + $0xe0] sm:$0xff]
      %v470 = vld [vmem:[%s440 + $0xe8] sm:$0xff]
      %v471 = vld [vmem:[%s440 + $0xf0] sm:$0xff]
      %v472 = vld [vmem:[%s440 + $0xf8] sm:$0xff]
      %v473 = vld [vmem:[%s440 + $0x100] sm:$0xff]
      %v474 = vld [vmem:[%s440 + $0x108] sm:$0xff]
      %v475 = vld [vmem:[%s440 + $0x110] sm:$0xff]
      %v476 = vld [vmem:[%s440 + $0x118] sm:$0xff]
      %v477 = vld [vmem:[%s440 + $0x120] sm:$0xff]
      %v478 = vld [vmem:[%s440 + $0x128] sm:$0xff]
      %v479 = vld [vmem:[%s440 + $0x130] sm:$0xff]
      %v480 = vld [vmem:[%s440 + $0x138] sm:$0xff]
      %v481 = vld [vmem:[%s440 + $0x140] sm:$0xff]
      %v482 = vld [vmem:[%s440 + $0x148] sm:$0xff]
      %v483 = vld [vmem:[%s440 + $0x150] sm:$0xff]
      %v484 = vld [vmem:[%s440 + $0x158] sm:$0xff]
      %v485 = vld [vmem:[%s440 + $0x160] sm:$0xff]
      %v486 = vld [vmem:[%s440 + $0x168] sm:$0xff]
      %v487 = vld [vmem:[%s440 + $0x170] sm:$0xff]
      %v488 = vld [vmem:[%s440 + $0x178] sm:$0xff]
      %v489 = vld [vmem:[%s440 + $0x180] sm:$0xff]
      %v490 = vld [vmem:[%s440 + $0x188] sm:$0xff]
      %v491 = vld [vmem:[%s440 + $0x190] sm:$0xff]
      %v492 = vld [vmem:[%s440 + $0x198] sm:$0xff]
      %v493 = vld [vmem:[%s440 + $0x1a0] sm:$0xff]
      %v494 = vld [vmem:[%s440 + $0x1a8] sm:$0xff]
      %v495 = vld [vmem:[%s440 + $0x1b0] sm:$0xff]
      %v496 = vld [vmem:[%s440 + $0x1b8] sm:$0xff]
      %v497 = vld [vmem:[%s440 + $0x1c0] sm:$0xff]
      %v498 = vld [vmem:[%s440 + $0x1c8] sm:$0xff]
      %v499 = vld [vmem:[%s440 + $0x1d0] sm:$0xff]
      %v500 = vld [vmem:[%s440 + $0x1d8] sm:$0xff]
      %v501 = vld [vmem:[%s440 + $0x1e0] sm:$0xff]
      %v502 = vld [vmem:[%s440 + $0x1e8] sm:$0xff]
      %v503 = vld [vmem:[%s440 + $0x1f0] sm:$0xff]
      %v504 = vld [vmem:[%s440 + $0x1f8] sm:$0xff]
      %505 = vmatprep.subr.mxu0 %v442
      %506 = vmatpush1.msra.mxu0 %v441
      %507 = vmatprep.subr.mxu0 %v444
      %508 = vmatpush1.msra.mxu0 %v443
      %509 = vmatprep.subr.mxu0 %v446
      %510 = vmatpush1.msra.mxu0 %v445
      %511 = vmatprep.subr.mxu0 %v448
      %512 = vmatpush1.msra.mxu0 %v447
      %513 = vmatprep.subr.mxu0 %v450
      %514 = vmatpush1.msra.mxu0 %v449
      %515 = vmatprep.subr.mxu0 %v452
      %516 = vmatpush1.msra.mxu0 %v451
      %517 = vmatprep.subr.mxu0 %v454
      %518 = vmatpush1.msra.mxu0 %v453
      %519 = vmatprep.subr.mxu0 %v456
      %520 = vmatpush1.msra.mxu0 %v455
      %521 = vmatprep.subr.mxu0 %v458
      %522 = vmatpush1.msra.mxu0 %v457
      %523 = vmatprep.subr.mxu0 %v460
      %524 = vmatpush1.msra.mxu0 %v459
      %525 = vmatprep.subr.mxu0 %v462
      %526 = vmatpush1.msra.mxu0 %v461
      %527 = vmatprep.subr.mxu0 %v464
      %528 = vmatpush1.msra.mxu0 %v463
      %529 = vmatprep.subr.mxu0 %v466
      %530 = vmatpush1.msra.mxu0 %v465
      %531 = vmatprep.subr.mxu0 %v468
      %532 = vmatpush1.msra.mxu0 %v467
      %533 = vmatprep.subr.mxu0 %v470
      %534 = vmatpush1.msra.mxu0 %v469
      %535 = vmatprep.subr.mxu0 %v472
      %536 = vmatpush1.msra.mxu0 %v471
      %537 = vmatprep.subr.mxu0 %v474
      %538 = vmatpush1.msra.mxu0 %v473
      %539 = vmatprep.subr.mxu0 %v476
      %540 = vmatpush1.msra.mxu0 %v475
      %541 = vmatprep.subr.mxu0 %v478
      %542 = vmatpush1.msra.mxu0 %v477
      %543 = vmatprep.subr.mxu0 %v480
      %544 = vmatpush1.msra.mxu0 %v479
      %545 = vmatprep.subr.mxu0 %v482
      %546 = vmatpush1.msra.mxu0 %v481
      %547 = vmatprep.subr.mxu0 %v484
      %548 = vmatpush1.msra.mxu0 %v483
      %549 = vmatprep.subr.mxu0 %v486
      %550 = vmatpush1.msra.mxu0 %v485
      %551 = vmatprep.subr.mxu0 %v488
      %552 = vmatpush1.msra.mxu0 %v487
      %553 = vmatprep.subr.mxu0 %v490
      %554 = vmatpush1.msra.mxu0 %v489
      %555 = vmatprep.subr.mxu0 %v492
      %556 = vmatpush1.msra.mxu0 %v491
      %557 = vmatprep.subr.mxu0 %v494
      %558 = vmatpush1.msra.mxu0 %v493
      %559 = vmatprep.subr.mxu0 %v496
      %560 = vmatpush1.msra.mxu0 %v495
      %561 = vmatprep.subr.mxu0 %v498
      %562 = vmatpush1.msra.mxu0 %v497
      %563 = vmatprep.subr.mxu0 %v500
      %564 = vmatpush1.msra.mxu0 %v499
      %565 = vmatprep.subr.mxu0 %v502
      %566 = vmatpush1.msra.mxu0 %v501
      %567 = vmatprep.subr.mxu0 %v504
      %568 = vmatpush1.msra.mxu0 %v503
      %569 = vmatprep.mubr.f32.mxu0 %v304
      %570 = vmatmul.mubr.f32.gmra.mrb[0].mxu0 %v303
      %v571 = vpop.f32.mrb[0].mxu0
      %v572 = vadd.f32 0.0, %v571
      %v573 = vpop.f32.mrb[0].mxu0
      %v574 = vadd.f32 0.0, %v573
      %575 = vdwg.mxu0
      %v578 = vrot.slane %v572, 1
      %v579 = vrot.slane %v574, 1
      %v582 = vadd.f32 %v436, %v578
      %v583 = vadd.f32 %v438, %v579
      %v584 = vsub.f32 0.0, %v582
      %v585 = vsub.f32 0.0, %v583
      %v586 = vmul.f32 %v584, 1.442695
      %v587 = vpow.pop %v586
      %v588 = vmul.f32 %v585, 1.442695
      %v589 = vpow.pop %v588
      %v590 = vadd.f32 %v587, 1.0
      %v591 = vadd.f32 %v589, 1.0
      %v592 = vrcp.pop %v590
      %v593 = vmul.f32 1.0, %v592
      %v594 = vrcp.pop %v591
      %v595 = vmul.f32 1.0, %v594
      %v596 = vlaneseq
      %v597 = vshrl.u32 %v596, 7
      %v598 = vsub.s32 0, %v597
      %v599 = vrot.slane %v593, %v598
      %v600 = vlaneseq
      %v601 = vshrl.u32 %v600, 7
      %v602 = vsub.s32 0, %v601
      %v603 = vrot.slane %v595, %v602
      %v604 = vmul.f32 %v264, %v599
      %v605 = vmul.f32 %v265, %v603
      %606 = vst [vmem:[%s170] sm:$0xff] %v604
      %607 = vst [vmem:[%s170 + $0x8] sm:$0xff] %v605
      %p608 = scmp.lt.s32.totalorder %s14, 1
      %s609 = scalar_select %p608, %s14, 1
      %s610 = smul.addr %s609, 2
      %s611 = smul.addr %s610, 8
      %s612 = scalar_lea.vmem %s3, %s611
      // Predicated region
      $region33: #{cbam_forward.1} parent=31 // pred_check
        %p613 = pneg %p100
      $region34: #{cbam_forward.1} parent=31 // pred_check_branch
        %615 = sbr.rel (%p613) target = $region36
      $region35: #{cbam_forward.1} parent=31 // pred_region
        _
      $region36: #{cbam_forward.1} parent=31 // pred_fallthru
        _
    $region32: #{cbam_forward.1} parent=5 // pred_fallthru
      _
    %p616 = scmp.le.s32.totalorder 2, %s9
    // Predicated region
    $region37: #{cbam_forward.1} parent=5 // pred_check
      %p617 = pneg %p616
    $region38: #{cbam_forward.1} parent=5 // pred_check_branch
      %619 = sbr.rel (%p617) target = $region40
    $region39: #{cbam_forward.1} parent=5 // pred_region
      %s620 = ssub.s32 %s9, 2
      // Predicated region
      $region41: #{cbam_forward.1} parent=39 // pred_check
        %p621 = pneg %p106
      $region42: #{cbam_forward.1} parent=39 // pred_check_branch
        %623 = sbr.rel (%p621) target = $region44
      $region43: #{cbam_forward.1} parent=39 // pred_region
        %p624 = scmp.lt.s32.totalorder %s15, 1
        %s625 = scalar_select %p624, %s15, 1
        %s626 = smul.addr %s625, 2
        %s627 = smul.addr %s626, 8
        %s628 = scalar_lea.vmem %s3, %s627
      $region44: #{cbam_forward.1} parent=39 // pred_fallthru
        _
    $region40: #{cbam_forward.1} parent=5 // pred_fallthru
      _
  $region6: #{cbam_forward.1} parent=0 // loop_footer
    %s13 = sadd.s32 1, %s9
  $region7: #{cbam_forward.1} parent=0 // loop_footer_branch
    %8 = sbr.rel target = $region3
  $region8: #{cbam_forward.1} parent=0 // loop_exit
    _

</llo_original>
